<compile_context>
chip_gen: v6e
topology: v6e:2x2x1
jax: 0.10.0
libtpu: 0.0.40
codegen_flags: <defaults>
</compile_context>

<pallas_src>
import functools

import jax
import jax.numpy as jnp
from jax.experimental import pallas as pl
from jax.experimental.pallas import tpu as pltpu


def _round_up(x: int, m: int) -> int:
    return ((x + m - 1) // m) * m


def _linear_kernel(x_ref, w_ref, b_ref, o_ref):
    # Grid = (i over M tiles, j over N tiles, k over K tiles).
    #
    # CORRECTNESS NOTE: we accumulate straight into o_ref. The output BlockSpec
    # index (i, j) is constant over k, so the block stays resident in VMEM for
    # the whole reduction. This is only valid because K is the *innermost*
    # ("arbitrary") grid axis — do not reorder the grid.
    k = pl.program_id(2)

    @pl.when(k == 0)
    def _init():
        # Seed the f32 accumulator with the broadcast bias row: bias is added
        # exactly once and no separate finalize / epilogue pass is needed.
        o_ref[...] = jnp.broadcast_to(b_ref[...].astype(o_ref.dtype), o_ref.shape)

    # MXU matmul with f32 accumulation directly into the VMEM-resident output
    # block (no acc scratch, no epilogue copy+add). Works for f32 or bf16 x/w.
    o_ref[...] += jnp.dot(x_ref[...], w_ref[...], preferred_element_type=jnp.float32)


@functools.partial(jax.jit, static_argnames=("tm", "tn", "tk"))
def linear_pallas(x, w, b, *, tm: int = 512, tn: int = 512, tk: int = 1024):
    M, K = x.shape
    K2, N = w.shape
    assert K == K2 and b.shape == (N,)

    # ------------------------------------------------------------- tile sizes
    # M / N are never padded: a single block equal to the full (possibly
    # unaligned) dim is a legal layout, and ragged final tiles only read
    # garbage into rows/cols whose stores are masked away.
    tm = M if M <= tm else tm - (tm % 8)       # sublane axis: multiple of 8
    tn = N if N <= tn else tn - (tn % 128)     # lane axis: multiple of 128

    # K (the contraction) is the only axis where padding matters for
    # correctness: a ragged K block would feed garbage into *valid* outputs.
    if K <= tk:
        tk, Kp = K, K                          # single K block, never padded
    else:
        Kp = _round_up(K, 128)
        t = max(128, min(tk, Kp) - (min(tk, Kp) % 128))
        while Kp % t != 0:                     # largest 128-multiple divisor <= tk
            t -= 128
        tk = t
    if Kp != K:
        # Zero-pad only the contraction axis (zeros contribute nothing to the
        # dot). At most 127 extra columns, and skipped entirely when
        # K % 128 == 0 — no wholesale extra HBM pass over x / w.
        x = jnp.pad(x, ((0, 0), (0, Kp - K)))
        w = jnp.pad(w, ((0, Kp - K), (0, 0)))

    m_grid = pl.cdiv(M, tm)
    n_grid = pl.cdiv(N, tn)
    k_grid = Kp // tk

    # v7x megacore: dimension_semantics can only shard M/N tiles across the
    # two TensorCores if at least one "parallel" axis has >= 2 tiles.
    if m_grid == 1 and n_grid == 1:
        if tn >= 256 and tn % 256 == 0:
            tn //= 2
            n_grid = pl.cdiv(N, tn)
        elif tm >= 16 and tm % 16 == 0:
            tm //= 2
            m_grid = pl.cdiv(M, tm)

    b2d = b.reshape(1, N)                      # lane-major bias row

    # Skinny-M problems are a pure weight stream (HBM / DMA-latency bound,
    # worst on v5e): use a 3-deep pipeline on the streamed w operand when the
    # stream is long enough to benefit.
    w_index_map = lambda i, j, k: (k, j)
    if m_grid == 1 and n_grid * k_grid >= 8:
        w_spec = pl.BlockSpec((tk, tn), w_index_map, pipeline_mode=pl.Buffered(3))
        w_bufs = 3
    else:
        w_spec = pl.BlockSpec((tk, tn), w_index_map)
        w_bufs = 2

    xb, wb, bb = x.dtype.itemsize, w.dtype.itemsize, b.dtype.itemsize
    working = (2 * tm * tk * xb + w_bufs * tk * tn * wb
               + 2 * tn * bb + 2 * tm * tn * 4)
    # Cap at 48 MiB: safe within v7x's 64 MiB/TC VMEM, ample on v5e/v6e
    # (raise the cap there only if you pass much larger custom tiles).
    vmem_limit = int(min(48 * 1024 * 1024, max(32 * 1024 * 1024, 1.5 * working)))

    # Actual HBM traffic: x is re-read once per N tile, w once per M tile.
    cost = pl.CostEstimate(
        flops=2 * M * N * Kp,
        transcendentals=0,
        bytes_accessed=(M * Kp * xb) * n_grid + (Kp * N * wb) * m_grid
        + N * bb + M * N * 4,
    )

    return pl.pallas_call(
        _linear_kernel,
        out_shape=jax.ShapeDtypeStruct((M, N), jnp.float32),
        grid_spec=pltpu.PrefetchScalarGridSpec(
            num_scalar_prefetch=0,
            # K innermost is REQUIRED (see kernel correctness note).
            grid=(m_grid, n_grid, k_grid),
            in_specs=[
                pl.BlockSpec((tm, tk), lambda i, j, k: (i, k)),
                w_spec,
                pl.BlockSpec((1, tn), lambda i, j, k: (0, j)),
            ],
            out_specs=pl.BlockSpec((tm, tn), lambda i, j, k: (i, j)),
        ),
        compiler_params=pltpu.CompilerParams(
            dimension_semantics=("parallel", "parallel", "arbitrary"),
            vmem_limit_bytes=vmem_limit,
        ),
        cost_estimate=cost,
    )(x, w, b2d)


if __name__ == "__main__":
    key = jax.random.PRNGKey(0)
    k_x, k_w, k_b, k_x2, k_w2, k_b2 = jax.random.split(key, 6)

    # Small shapes consistent with the module (batch=8, in_dim=32, out_dim=64).
    batch, in_dim, out_dim = 8, 32, 64
    x = jax.random.normal(k_x, (batch, in_dim), dtype=jnp.float32)
    w = jax.random.normal(k_w, (in_dim, out_dim), dtype=jnp.float32)  # torch.randn init
    b = jax.random.normal(k_b, (out_dim,), dtype=jnp.float32)

    y = linear_pallas(x, w, b)
    jax.block_until_ready(y)
    y_ref = x @ w + b
    assert y.shape == y_ref.shape
    assert jnp.allclose(y, y_ref, atol=1e-5, rtol=1e-5)

    # Second check: ragged M/N tiles + multi-K-tile accumulation + K zero-pad.
    M2, K2, N2 = 40, 1056, 192
    x2 = jax.random.normal(k_x2, (M2, K2), dtype=jnp.float32)
    w2 = jax.random.normal(k_w2, (K2, N2), dtype=jnp.float32)
    b2 = jax.random.normal(k_b2, (N2,), dtype=jnp.float32)
    y2 = linear_pallas(x2, w2, b2)
    jax.block_until_ready(y2)
    y2_ref = jnp.dot(x2, w2, precision=jax.lax.Precision.HIGHEST) + b2
    assert jnp.allclose(y2, y2_ref, atol=1e-2, rtol=1e-3)

    print("KERNEL_OK")
</pallas_src>

<mosaic_0001>
module attributes {stable_mosaic.version = 11 : i64} {
  func.func @_linear_kernel(%arg0: i32, %arg1: i32, %arg2: i32, %arg3: memref<8x32xf32, #tpu.memory_space<vmem>>, %arg4: memref<32x64xf32, #tpu.memory_space<vmem>>, %arg5: memref<1x64xf32, #tpu.memory_space<vmem>>, %arg6: memref<8x64xf32, #tpu.memory_space<vmem>>) attributes {dimension_semantics = [#tpu.dimension_semantics<parallel>, #tpu.dimension_semantics<parallel>, #tpu.dimension_semantics<arbitrary>], iteration_bounds = array<i64: 1, 1, 1>, scalar_prefetch = 0 : i64, scratch_operands = 0 : i64, tpu.core_type = #tpu.core_type<tc>, window_params = [{transform_indices = @transform_0, window_bounds = array<i64: 8, 32>}, {transform_indices = @transform_1, window_bounds = array<i64: 32, 64>}, {transform_indices = @transform_2, window_bounds = array<i64: 1, 64>}, {transform_indices = @transform_3, window_bounds = array<i64: 8, 64>}]} {
    %c0_i32 = arith.constant 0 : i32
    %0 = arith.cmpi eq, %arg2, %c0_i32 : i32
    %1 = arith.extui %0 : i1 to i32
    %c0_i32_0 = arith.constant 0 : i32
    %2 = arith.cmpi ne, %1, %c0_i32_0 : i32
    scf.if %2 {
      %c0_8 = arith.constant 0 : index
      %c0_9 = arith.constant 0 : index
      %9 = vector.load %arg5[%c0_8, %c0_9] : memref<1x64xf32, #tpu.memory_space<vmem>>, vector<1x64xf32>
      %10 = vector.shape_cast %9 : vector<1x64xf32> to vector<1x64xf32>
      %11 = vector.broadcast %10 : vector<1x64xf32> to vector<8x64xf32>
      %c0_10 = arith.constant 0 : index
      %c0_11 = arith.constant 0 : index
      %12 = vector.load %arg6[%c0_10, %c0_11] : memref<8x64xf32, #tpu.memory_space<vmem>>, vector<8x64xf32>
      tpu.vector_store %arg6[%c0_10, %c0_11], %11 {strides = array<i32>} : memref<8x64xf32, #tpu.memory_space<vmem>>, vector<8x64xf32>,
    } else {
    }
    %c0 = arith.constant 0 : index
    %c0_1 = arith.constant 0 : index
    %3 = vector.load %arg6[%c0, %c0_1] : memref<8x64xf32, #tpu.memory_space<vmem>>, vector<8x64xf32>
    %c0_2 = arith.constant 0 : index
    %c0_3 = arith.constant 0 : index
    %4 = vector.load %arg3[%c0_2, %c0_3] : memref<8x32xf32, #tpu.memory_space<vmem>>, vector<8x32xf32>
    %c0_4 = arith.constant 0 : index
    %c0_5 = arith.constant 0 : index
    %5 = vector.load %arg4[%c0_4, %c0_5] : memref<32x64xf32, #tpu.memory_space<vmem>>, vector<32x64xf32>
    %cst = arith.constant dense<0.000000e+00> : vector<8x64xf32>
    %6 = tpu.matmul %4, %5, %cst {dimension_numbers = #tpu.dot_dimension_numbers<[1], [0], [0], [1], [0, 0, 1, 1], [], []>} : vector<8x32xf32>, vector<32x64xf32>, vector<8x64xf32> -> vector<8x64xf32>
    %7 = arith.addf %3, %6 : vector<8x64xf32>
    %c0_6 = arith.constant 0 : index
    %c0_7 = arith.constant 0 : index
    %8 = vector.load %arg6[%c0_6, %c0_7] : memref<8x64xf32, #tpu.memory_space<vmem>>, vector<8x64xf32>
    tpu.vector_store %arg6[%c0_6, %c0_7], %7 {strides = array<i32>} : memref<8x64xf32, #tpu.memory_space<vmem>>, vector<8x64xf32>,
    return
  }
  func.func @transform_0(%arg0: i32, %arg1: i32, %arg2: i32) -> (i32, i32) {
    %c0_i32 = arith.constant 0 : i32
    return %arg0, %arg2 : i32, i32
  }
  func.func @transform_1(%arg0: i32, %arg1: i32, %arg2: i32) -> (i32, i32) {
    %c0_i32 = arith.constant 0 : i32
    return %arg2, %arg1 : i32, i32
  }
  func.func @transform_2(%arg0: i32, %arg1: i32, %arg2: i32) -> (i32, i32) {
    %c0_i32 = arith.constant 0 : i32
    %c0_i32_0 = arith.constant 0 : i32
    return %c0_i32, %arg1 : i32, i32
  }
  func.func @transform_3(%arg0: i32, %arg1: i32, %arg2: i32) -> (i32, i32) {
    %c0_i32 = arith.constant 0 : i32
    return %arg0, %arg1 : i32, i32
  }
}

</mosaic_0001>

<llo_original>
// kernel: linear_pallas.1
$region0: #{linear_pallas.1}
  #allocation0 [shape = 'u32[]', space=smem, size = 0x4, offset = 0x4, fixed_abs, tag = 'smem constant byte address 0x4 - core index']
  #allocation1 [shape = 'u32[144,128]{1,0:T(1,128)}', space=vmem, size = 0x12000, scoped, tag = 'internal scratch']
  %s0 = inlined_call_operand.hbm [shape: f32[8,32], index: 0, kind: input, shape index: {}]
  %s1 = inlined_call_operand.hbm [shape: f32[32,64], index: 1, kind: input, shape index: {}]
  %s2 = inlined_call_operand.vmem [shape: f32[1,64], index: 2, kind: input, shape index: {}]
  %s3 = inlined_call_operand.hbm [shape: f32[8,64], index: 3, kind: output, shape index: {}]
  %s4 = sld [smem:[#allocation0]]
  $region34: #{linear_pallas.1} parent=0
    _
  %s6 = ssub.s32 1, %s4
  %s7 = scalar_select 0, %s6, %s4
  $region1: #{linear_pallas.1} parent=0
    #allocation2 [shape = 'u8[4096]{0}', space=vmem, size = 0x1000, scoped, tag = 'input window, operand 0, single buffered']
    #allocation3 [shape = 's32[1]{0}', space=sflag, size = 0x4, scoped, tag = 'scoped memory for linear_pallas.1']
    #allocation4 [shape = 's32[1]{0}', space=sflag, size = 0x4, scoped, tag = 'scoped memory for linear_pallas.1']
    #allocation5 [shape = 'u8[16384]{0}', space=vmem, size = 0x4000, scoped, tag = 'input window, operand 1, single buffered']
    #allocation6 [shape = 's32[1]{0}', space=sflag, size = 0x4, scoped, tag = 'scoped memory for linear_pallas.1']
    #allocation7 [shape = 'u8[4096]{0}', space=vmem, size = 0x1000, scoped, tag = 'output window, operand 0, single buffered']
    %8 = vsyncpa [#allocation3], 0
    %9 = vsyncpa [#allocation6], 0
    %10 = vsyncpa [#allocation4], 0
    // Predicated region
    $region2: #{linear_pallas.1} parent=1 // pred_check
      _
    $region3: #{linear_pallas.1} parent=1 // pred_check_branch
      %12 = sbr.rel (0) target = $region5
    $region4: #{linear_pallas.1} parent=1 // pred_region
      %s14 = ssub.s32 128, 128
      %15 = vsyncadd [#allocation3], %s14
      %s17 = sshll.u32 [#allocation2], 4
      %s18 = int_to_ptr.vmem [resolvable:$true] %s17
      %20 = dma.hbm_to_vmem [thread:$0]  %s0, 128, %s18, [#allocation3]
    $region5: #{linear_pallas.1} parent=1 // pred_fallthru
      _
    // Predicated region
    $region6: #{linear_pallas.1} parent=1 // pred_check
      _
    $region7: #{linear_pallas.1} parent=1 // pred_check_branch
      %22 = sbr.rel (0) target = $region9
    $region8: #{linear_pallas.1} parent=1 // pred_region
      %s24 = ssub.s32 512, 512
      %25 = vsyncadd [#allocation6], %s24
      %s26 = sshll.u32 [#allocation5], 4
      %s27 = int_to_ptr.vmem [resolvable:$true] %s26
      %32 = dma.hbm_to_vmem [thread:$0]  %s1, 512, %s27, [#allocation6], 128, 128, 8
    $region9: #{linear_pallas.1} parent=1 // pred_fallthru
      _
    // Predicated region
    $region10: #{linear_pallas.1} parent=1 // pred_check
      _
    $region11: #{linear_pallas.1} parent=1 // pred_check_branch
      %34 = sbr.rel (0) target = $region13
    $region12: #{linear_pallas.1} parent=1 // pred_region
      _
    $region13: #{linear_pallas.1} parent=1 // pred_fallthru
      _
    // Predicated region
    $region14: #{linear_pallas.1} parent=1 // pred_check
      _
    $region15: #{linear_pallas.1} parent=1 // pred_check_branch
      %36 = sbr.rel (0) target = $region17
    $region16: #{linear_pallas.1} parent=1 // pred_region
      %37 = dma.done [#allocation3], 128
    $region17: #{linear_pallas.1} parent=1 // pred_fallthru
      _
    // Predicated region
    $region18: #{linear_pallas.1} parent=1 // pred_check
      _
    $region19: #{linear_pallas.1} parent=1 // pred_check_branch
      %39 = sbr.rel (0) target = $region21
    $region20: #{linear_pallas.1} parent=1 // pred_region
      %40 = dma.done [#allocation6], 512
    $region21: #{linear_pallas.1} parent=1 // pred_fallthru
      _
    %p41 = scmp.eq.s32.totalorder 0, 0
    // Predicated region
    $region22: #{linear_pallas.1} parent=1 // pred_check
      %p42 = pneg %p41
    $region23: #{linear_pallas.1} parent=1 // pred_check_branch
      %44 = sbr.rel (%p42) target = $region25
    $region24: #{linear_pallas.1} parent=1 // pred_region
      %v45 = vld [vmem:[%s2] sm:$0x1]
      %v47 = vlaneseq
      %v48 = vshrl.u32 %v47, 7
      %v49 = vsub.s32 0, %v48
      %v50 = vrot.slane %v45, %v49
      %vm52 = vcmask 523264
      %53 = vst.msk [vmem:[#allocation7] sm:$0xff] %vm52, %v50
    $region25: #{linear_pallas.1} parent=1 // pred_fallthru
      _
    %v54 = vld [vmem:[#allocation7] sm:$0xff]
    %v55 = vld [vmem:[#allocation2] sm:$0xff]
    %v56 = vld [vmem:[#allocation5] sm:$0xff]
    %v57 = vld [vmem:[#allocation5 + $0x8] sm:$0xff]
    %v58 = vld [vmem:[#allocation5 + $0x10] sm:$0xff]
    %v59 = vld [vmem:[#allocation5 + $0x18] sm:$0xff]
    %vm60 = vcmask 261120
    %v62 = vsel %vm60, %v55, 0
    %64 = vmatprep.subr.mxu0 0.0
    %65 = vmatpush1.msra.mxu0 0.0
    %66 = vmatprep.subr.mxu0 0.0
    %67 = vmatpush1.msra.mxu0 0.0
    %68 = vmatprep.subr.mxu0 0.0
    %69 = vmatpush1.msra.mxu0 0.0
    %70 = vmatprep.subr.mxu0 0.0
    %71 = vmatpush1.msra.mxu0 0.0
    %72 = vmatprep.subr.mxu0 0.0
    %73 = vmatpush1.msra.mxu0 0.0
    %74 = vmatprep.subr.mxu0 0.0
    %75 = vmatpush1.msra.mxu0 0.0
    %76 = vmatprep.subr.mxu0 0.0
    %77 = vmatpush1.msra.mxu0 0.0
    %78 = vmatprep.subr.mxu0 0.0
    %79 = vmatpush1.msra.mxu0 0.0
    %80 = vmatprep.subr.mxu0 0.0
    %81 = vmatpush1.msra.mxu0 0.0
    %82 = vmatprep.subr.mxu0 0.0
    %83 = vmatpush1.msra.mxu0 0.0
    %84 = vmatprep.subr.mxu0 0.0
    %85 = vmatpush1.msra.mxu0 0.0
    %86 = vmatprep.subr.mxu0 0.0
    %87 = vmatpush1.msra.mxu0 0.0
    %88 = vmatprep.subr.mxu0 0.0
    %89 = vmatpush1.msra.mxu0 %v59
    %90 = vmatprep.subr.mxu0 0.0
    %91 = vmatpush1.msra.mxu0 %v58
    %92 = vmatprep.subr.mxu0 0.0
    %93 = vmatpush1.msra.mxu0 %v57
    %94 = vmatprep.subr.mxu0 0.0
    %95 = vmatpush1.msra.mxu0 %v56
    %96 = vmatprep.subr.mxu0 0.0
    %97 = vmatpush2.msra.mxu0 0.0
    %98 = vmatprep.subr.mxu0 0.0
    %99 = vmatpush2.msra.mxu0 0.0
    %100 = vmatprep.subr.mxu0 0.0
    %101 = vmatpush2.msra.mxu0 0.0
    %102 = vmatprep.subr.mxu0 0.0
    %103 = vmatpush2.msra.mxu0 0.0
    %104 = vmatprep.subr.mxu0 0.0
    %105 = vmatpush2.msra.mxu0 0.0
    %106 = vmatprep.subr.mxu0 0.0
    %107 = vmatpush2.msra.mxu0 0.0
    %108 = vmatprep.subr.mxu0 0.0
    %109 = vmatpush2.msra.mxu0 0.0
    %110 = vmatprep.subr.mxu0 0.0
    %111 = vmatpush2.msra.mxu0 0.0
    %112 = vmatprep.subr.mxu0 0.0
    %113 = vmatpush2.msra.mxu0 0.0
    %114 = vmatprep.subr.mxu0 0.0
    %115 = vmatpush2.msra.mxu0 0.0
    %116 = vmatprep.subr.mxu0 0.0
    %117 = vmatpush2.msra.mxu0 0.0
    %118 = vmatprep.subr.mxu0 0.0
    %119 = vmatpush2.msra.mxu0 0.0
    %120 = vmatprep.subr.mxu0 0.0
    %121 = vmatpush2.msra.mxu0 0.0
    %122 = vmatprep.subr.mxu0 0.0
    %123 = vmatpush2.msra.mxu0 0.0
    %124 = vmatprep.subr.mxu0 0.0
    %125 = vmatpush2.msra.mxu0 0.0
    %126 = vmatprep.subr.mxu0 0.0
    %127 = vmatpush2.msra.mxu0 0.0
    %128 = vmatprep.mubr.f32.mxu0 0.0
    %129 = vmatmul.mubr.f32.gmra.mxu0 %v62
    %v130 = vpop.f32.mrf.mxu0
    %v131 = vadd.f32 0.0, %v130
    %v132 = vpop.f32.mrf.mxu0
    %133 = vdwg.mxu0
    %v134 = vadd.f32 %v54, %v131
    %vm135 = vcmask 523264
    %136 = vst.msk [vmem:[#allocation7] sm:$0xff] %vm135, %v134
    // Predicated region
    $region26: #{linear_pallas.1} parent=1 // pred_check
      _
    $region27: #{linear_pallas.1} parent=1 // pred_check_branch
      %138 = sbr.rel (0) target = $region29
    $region28: #{linear_pallas.1} parent=1 // pred_region
      %s140 = ssub.s32 128, 128
      %141 = vsyncadd [#allocation4], %s140
      %s143 = sshll.u32 [#allocation7], 4
      %s144 = int_to_ptr.vmem [resolvable:$true] %s143
      %146 = dma.vmem_to_hbm [thread:$0]  %s144, 128, %s3, [#allocation4]
    $region29: #{linear_pallas.1} parent=1 // pred_fallthru
      _
    // Predicated region
    $region30: #{linear_pallas.1} parent=1 // pred_check
      _
    $region31: #{linear_pallas.1} parent=1 // pred_check_branch
      %148 = sbr.rel (0) target = $region33
    $region32: #{linear_pallas.1} parent=1 // pred_region
      %149 = dma.done [#allocation4], 128
    $region33: #{linear_pallas.1} parent=1 // pred_fallthru
      _
    %150 = vsyncpa [#allocation3], 1
    %151 = vsyncpa [#allocation6], 1
    %152 = vsyncpa [#allocation4], 1

</llo_original>
